<compile_context>
chip_gen: v7x
topology: tpu7x:2x2x1
jax: 0.10.0
libtpu: 0.0.40
codegen_flags: <defaults>
</compile_context>

<pallas_src>
import functools

import jax
import jax.numpy as jnp
from jax.experimental import pallas as pl
from jax.experimental.pallas import tpu as pltpu

_VMEM_TILE_BUDGET = 44 * 1024 * 1024   # conservative: fits v7x's 64 MiB physical VMEM
_VMEM_LIMIT_BYTES = 56 * 1024 * 1024   # above 16/32 MiB scoped defaults, < v7x physical


def _round_up(x: int, m: int) -> int:
    return ((x + m - 1) // m) * m


def _kernel(x_ref, w_ref, b_ref, o_ref, acc_ref):
    # x_ref:   [TB, tk]      f32/bf16   batch tile x K slice
    # w_ref:   [tk, OUT_p]   f32/bf16   weight, already transposed to [K, N]
    # b_ref:   [1, OUT_p]    f32
    # o_ref:   [TB, OUT_p]   f32 (or bf16)
    # acc_ref: [TB, OUT_p]   f32 scratch, resident across the K grid axis
    k = pl.program_id(1)

    @pl.when(k == 0)
    def _():
        acc_ref[...] = jnp.zeros_like(acc_ref)

    # Canonical [M, K] @ [K, N] -> MXU with f32 accumulation (no transpose op).
    acc_ref[...] += jnp.dot(x_ref[...], w_ref[...],
                            preferred_element_type=jnp.float32)

    @pl.when(k == pl.num_programs(1) - 1)
    def _():
        y = acc_ref[...] + b_ref[...].astype(jnp.float32)
        # F.normalize(y, dim=1, p=2): denom = ||y||_2.clamp_min(1e-12).
        # sqrt is monotone so max(sq, 1e-24) == clamp_min(norm, 1e-12);
        # full-precision rsqrt runs on the EUP slot (off the VPU critical path).
        sq = jnp.sum(y * y, axis=1, keepdims=True)
        inv = jax.lax.rsqrt(jnp.maximum(sq, jnp.float32(1e-24)))
        o_ref[...] = (y * inv).astype(o_ref.dtype)


def _footprint(TB, tk, OUT_p, num_k, in_bytes, out_bytes):
    """Approximate VMEM bytes for one grid step's buffers."""
    w_bufs = 1 if num_k == 1 else 2
    return (2 * TB * tk * in_bytes            # x blocks (double-buffered)
            + w_bufs * tk * OUT_p * in_bytes  # weight blocks
            + 2 * TB * OUT_p * out_bytes      # output blocks (double-buffered)
            + TB * OUT_p * 4                  # f32 accumulator scratch
            + 2 * OUT_p * 4)                  # bias


@functools.partial(
    jax.jit,
    static_argnames=("tb", "tk", "compute_dtype", "out_dtype",
                     "single_buffer_invariant"))
def model_with_normalize(samples, weight, bias, *, tb=512, tk=None,
                         compute_dtype=None, out_dtype=jnp.float32,
                         single_buffer_invariant=True):
    """samples [B, IN], weight [OUT, IN] (PyTorch Linear layout), bias [OUT]
    -> [B, OUT] L2-normalized along dim=1.

    compute_dtype: None -> f32 MXU operands (exact PyTorch semantics, forced
        even if inputs arrive as bf16); jnp.bfloat16 -> bf16 operands with f32
        accumulation (halves x/W HBM traffic; fast path on v5e/v6e/v7x).
    out_dtype: output dtype (bf16 halves writeback traffic if allowed).
    """
    B, IN = samples.shape
    OUT, IN_w = weight.shape
    assert IN == IN_w and bias.shape == (OUT,)

    op_dtype = jnp.dtype(jnp.float32) if compute_dtype is None else jnp.dtype(compute_dtype)
    in_bytes = op_dtype.itemsize
    out_bytes = jnp.dtype(out_dtype).itemsize

    IN_p = _round_up(IN, 128)
    OUT_p = _round_up(OUT, 128)

    # Batch tile: multiple of 8, as large as tb, but split into >=2 tiles when
    # B allows it so v7x's two TensorCores both get work on the "parallel" axis.
    TB = min(tb, _round_up(B, 8))
    if B > 8:
        TB = min(TB, max(8, _round_up(-(-B // 2), 8)))

    # K tile: largest divisor of IN_p (multiple of 128, <= 512) whose buffers
    # fit the conservative VMEM budget; otherwise the weight streams over K.
    if tk is None:
        n = IN_p // 128
        choices = [d * 128 for d in range(min(n, 4), 0, -1) if n % d == 0]
        tk = choices[-1]
        for cand in choices:
            if _footprint(TB, cand, OUT_p, IN_p // cand,
                          in_bytes, out_bytes) <= _VMEM_TILE_BUDGET:
                tk = cand
                break
    assert tk % 128 == 0
    IN_pad = _round_up(IN_p, tk)
    num_k = IN_pad // tk
    # Shrink the batch tile if even tk=128 does not fit (very large OUT).
    while TB > 8 and _footprint(TB, tk, OUT_p, num_k,
                                in_bytes, out_bytes) > _VMEM_TILE_BUDGET:
        TB = _round_up(TB // 2, 8)
    B_p = _round_up(B, TB)

    # Lane-dense padded operands; skip the extra HBM pass when already aligned.
    if B_p == B and IN_pad == IN and samples.dtype == op_dtype:
        x_p = samples
    else:
        x_p = jnp.zeros((B_p, IN_pad), op_dtype).at[:B, :IN].set(
            samples.astype(op_dtype))
    # Transpose folded into the single weight padding copy ([K, N] MXU layout).
    # TODO(synk): in a serving path weight/bias prep is call-invariant — hoist
    # it out of the per-call hot loop (prepare once, reuse across calls).
    w_p = jnp.zeros((IN_pad, OUT_p), op_dtype).at[:IN, :OUT].set(
        weight.T.astype(op_dtype))
    b_p = jnp.zeros((1, OUT_p), jnp.float32).at[0, :OUT].set(
        bias.astype(jnp.float32))

    def _spec(shape, index_map, mode=None):
        if mode is None:
            return pl.BlockSpec(shape, index_map)
        return pl.BlockSpec(shape, index_map, pipeline_mode=mode)

    # Grid-invariant blocks do not need double buffering.
    invariant = pl.Buffered(1) if single_buffer_invariant else None
    w_mode = invariant if num_k == 1 else None   # streams (double-buffered) over K otherwise
    b_mode = invariant

    out_p = pl.pallas_call(
        _kernel,
        out_shape=jax.ShapeDtypeStruct((B_p, OUT_p), out_dtype),
        grid_spec=pltpu.PrefetchScalarGridSpec(
            num_scalar_prefetch=0,
            grid=(B_p // TB, num_k),
            in_specs=[
                _spec((TB, tk), lambda i, k: (i, k)),              # x
                _spec((tk, OUT_p), lambda i, k: (k, 0), w_mode),   # weight [K, N]
                _spec((1, OUT_p), lambda i, k: (0, 0), b_mode),    # bias
            ],
            out_specs=pl.BlockSpec((TB, OUT_p), lambda i, k: (i, 0)),
            scratch_shapes=[pltpu.VMEM((TB, OUT_p), jnp.float32)],
        ),
        compiler_params=pltpu.CompilerParams(
            dimension_semantics=("parallel", "arbitrary"),
            vmem_limit_bytes=_VMEM_LIMIT_BYTES,
        ),
    )(x_p, w_p, b_p)

    if B_p == B and OUT_p == OUT:
        return out_p
    return out_p[:B, :OUT]


def _reference(samples, weight, bias):
    y = samples @ weight.T + bias
    denom = jnp.maximum(jnp.linalg.norm(y, axis=1, keepdims=True), 1e-12)
    return y / denom


if __name__ == "__main__":
    key = jax.random.PRNGKey(0)
    k_x, k_w, k_b, k_x2, k_w2, k_b2 = jax.random.split(key, 6)

    # --- Small exact-semantics check (batch=8, hidden=32, embed=64) ---
    B, IN, OUT = 8, 32, 64
    samples = jax.random.normal(k_x, (B, IN), dtype=jnp.float32)
    weight = jax.random.normal(k_w, (OUT, IN), dtype=jnp.float32) * 0.1
    bias = jax.random.normal(k_b, (OUT,), dtype=jnp.float32) * 0.1
    ref = _reference(samples, weight, bias)

    # Single-buffering grid-invariant blocks is a perf hint only; fall back to
    # the default double-buffered pipeline if this jax build rejects it.
    sb = True
    try:
        out = jax.block_until_ready(
            model_with_normalize(samples, weight, bias,
                                 single_buffer_invariant=True))
    except Exception:
        sb = False
        out = jax.block_until_ready(
            model_with_normalize(samples, weight, bias,
                                 single_buffer_invariant=False))
    assert out.shape == (B, OUT)
    assert jnp.allclose(out, ref, atol=1e-5, rtol=1e-5), "f32 kernel mismatch"
    assert jnp.allclose(jnp.linalg.norm(out, axis=1), 1.0, atol=1e-5)

    # --- Multi-tile grid: 2 batch tiles x 3 K steps (forced tk=128) ---
    B2, IN2, OUT2 = 24, 320, 192
    samples2 = jax.random.normal(k_x2, (B2, IN2), dtype=jnp.float32)
    weight2 = jax.random.normal(k_w2, (OUT2, IN2), dtype=jnp.float32) * 0.05
    bias2 = jax.random.normal(k_b2, (OUT2,), dtype=jnp.float32) * 0.05
    ref2 = _reference(samples2, weight2, bias2)
    out2 = jax.block_until_ready(
        model_with_normalize(samples2, weight2, bias2, tk=128,
                             single_buffer_invariant=sb))
    assert out2.shape == (B2, OUT2)
    assert jnp.allclose(out2, ref2, atol=1e-5, rtol=1e-5), "K-split kernel mismatch"

    # --- bf16 MXU operands + f32 accumulation fast path (looser tolerance) ---
    out_bf16 = jax.block_until_ready(
        model_with_normalize(samples, weight, bias,
                             compute_dtype=jnp.bfloat16,
                             single_buffer_invariant=sb))
    assert jnp.allclose(out_bf16, ref, atol=2e-2, rtol=2e-2), "bf16 kernel mismatch"
    assert jnp.allclose(jnp.linalg.norm(out_bf16, axis=1), 1.0, atol=1e-2)

    print("KERNEL_OK")
</pallas_src>

<mosaic_0001>
module attributes {stable_mosaic.version = 11 : i64} {
  func.func @_kernel(%arg0: i32, %arg1: i32, %arg2: memref<8x128xf32, #tpu.memory_space<vmem>>, %arg3: memref<128x128xf32, #tpu.memory_space<vmem>>, %arg4: memref<1x128xf32, #tpu.memory_space<vmem>>, %arg5: memref<8x128xf32, #tpu.memory_space<vmem>>, %arg6: memref<8x128xf32, #tpu.memory_space<vmem>>) attributes {dimension_semantics = [#tpu.dimension_semantics<parallel>, #tpu.dimension_semantics<arbitrary>], iteration_bounds = array<i64: 1, 1>, scalar_prefetch = 0 : i64, scratch_operands = 1 : i64, tpu.core_type = #tpu.core_type<tc>, window_params = [{transform_indices = @transform_0, window_bounds = array<i64: 8, 128>}, {pipeline_mode = #tpu.pipeline_mode<synchronous>, transform_indices = @transform_1, window_bounds = array<i64: 128, 128>}, {pipeline_mode = #tpu.pipeline_mode<synchronous>, transform_indices = @transform_2, window_bounds = array<i64: 1, 128>}, {transform_indices = @transform_3, window_bounds = array<i64: 8, 128>}]} {
    %c0_i32 = arith.constant 0 : i32
    %0 = arith.cmpi eq, %arg1, %c0_i32 : i32
    %1 = arith.extui %0 : i1 to i32
    %c0_i32_0 = arith.constant 0 : i32
    %2 = arith.cmpi ne, %1, %c0_i32_0 : i32
    scf.if %2 {
      %cst_10 = arith.constant 0.000000e+00 : f32
      %12 = vector.broadcast %cst_10 : f32 to vector<8x128xf32>
      %c0_11 = arith.constant 0 : index
      %c0_12 = arith.constant 0 : index
      %13 = vector.load %arg6[%c0_11, %c0_12] : memref<8x128xf32, #tpu.memory_space<vmem>>, vector<8x128xf32>
      tpu.vector_store %arg6[%c0_11, %c0_12], %12 {strides = array<i32>} : memref<8x128xf32, #tpu.memory_space<vmem>>, vector<8x128xf32>,
    } else {
    }
    %c0 = arith.constant 0 : index
    %c0_1 = arith.constant 0 : index
    %3 = vector.load %arg6[%c0, %c0_1] : memref<8x128xf32, #tpu.memory_space<vmem>>, vector<8x128xf32>
    %c0_2 = arith.constant 0 : index
    %c0_3 = arith.constant 0 : index
    %4 = vector.load %arg2[%c0_2, %c0_3] : memref<8x128xf32, #tpu.memory_space<vmem>>, vector<8x128xf32>
    %c0_4 = arith.constant 0 : index
    %c0_5 = arith.constant 0 : index
    %5 = vector.load %arg3[%c0_4, %c0_5] : memref<128x128xf32, #tpu.memory_space<vmem>>, vector<128x128xf32>
    %cst = arith.constant dense<0.000000e+00> : vector<8x128xf32>
    %6 = tpu.matmul %4, %5, %cst {dimension_numbers = #tpu.dot_dimension_numbers<[1], [0], [0], [1], [0, 0, 1, 1], [], []>} : vector<8x128xf32>, vector<128x128xf32>, vector<8x128xf32> -> vector<8x128xf32>
    %7 = arith.addf %3, %6 : vector<8x128xf32>
    %c0_6 = arith.constant 0 : index
    %c0_7 = arith.constant 0 : index
    %8 = vector.load %arg6[%c0_6, %c0_7] : memref<8x128xf32, #tpu.memory_space<vmem>>, vector<8x128xf32>
    tpu.vector_store %arg6[%c0_6, %c0_7], %7 {strides = array<i32>} : memref<8x128xf32, #tpu.memory_space<vmem>>, vector<8x128xf32>,
    %c0_i32_8 = arith.constant 0 : i32
    %9 = arith.cmpi eq, %arg1, %c0_i32_8 : i32
    %10 = arith.extui %9 : i1 to i32
    %c0_i32_9 = arith.constant 0 : i32
    %11 = arith.cmpi ne, %10, %c0_i32_9 : i32
    scf.if %11 {
      %c0_10 = arith.constant 0 : index
      %c0_11 = arith.constant 0 : index
      %12 = vector.load %arg6[%c0_10, %c0_11] : memref<8x128xf32, #tpu.memory_space<vmem>>, vector<8x128xf32>
      %c0_12 = arith.constant 0 : index
      %c0_13 = arith.constant 0 : index
      %13 = vector.load %arg4[%c0_12, %c0_13] : memref<1x128xf32, #tpu.memory_space<vmem>>, vector<1x128xf32>
      %14 = vector.broadcast %13 : vector<1x128xf32> to vector<8x128xf32>
      %15 = arith.addf %12, %14 : vector<8x128xf32>
      %16 = arith.mulf %15, %15 : vector<8x128xf32>
      %cst_14 = arith.constant dense<0.000000e+00> : vector<8xf32>
      %17 = vector.multi_reduction <add>, %16, %cst_14 [1] : vector<8x128xf32> to vector<8xf32>
      %18 = vector.shape_cast %17 : vector<8xf32> to vector<8x1xf32>
      %cst_15 = arith.constant 1.000000e-24 : f32
      %19 = vector.broadcast %cst_15 : f32 to vector<8x1xf32>
      %20 = arith.maximumf %18, %19 : vector<8x1xf32>
      %21 = math.rsqrt %20 : vector<8x1xf32>
      %22 = vector.broadcast %21 : vector<8x1xf32> to vector<8x128xf32>
      %23 = arith.mulf %15, %22 : vector<8x128xf32>
      %c0_16 = arith.constant 0 : index
      %c0_17 = arith.constant 0 : index
      %24 = vector.load %arg5[%c0_16, %c0_17] : memref<8x128xf32, #tpu.memory_space<vmem>>, vector<8x128xf32>
      tpu.vector_store %arg5[%c0_16, %c0_17], %23 {strides = array<i32>} : memref<8x128xf32, #tpu.memory_space<vmem>>, vector<8x128xf32>,
    } else {
    }
    return
  }
  func.func @transform_0(%arg0: i32, %arg1: i32) -> (i32, i32) {
    %c0_i32 = arith.constant 0 : i32
    return %arg0, %arg1 : i32, i32
  }
  func.func @transform_1(%arg0: i32, %arg1: i32) -> (i32, i32) {
    %c0_i32 = arith.constant 0 : i32
    %c0_i32_0 = arith.constant 0 : i32
    return %arg1, %c0_i32 : i32, i32
  }
  func.func @transform_2(%arg0: i32, %arg1: i32) -> (i32, i32) {
    %c0_i32 = arith.constant 0 : i32
    %c0_i32_0 = arith.constant 0 : i32
    %c0_i32_1 = arith.constant 0 : i32
    return %c0_i32, %c0_i32_0 : i32, i32
  }
  func.func @transform_3(%arg0: i32, %arg1: i32) -> (i32, i32) {
    %c0_i32 = arith.constant 0 : i32
    %c0_i32_0 = arith.constant 0 : i32
    return %arg0, %c0_i32 : i32, i32
  }
}

module attributes {stable_mosaic.version = 11 : i64} {
  func.func @_kernel(%arg0: i32, %arg1: i32, %arg2: memref<8x128xf32, #tpu.memory_space<vmem>>, %arg3: memref<128x128xf32, #tpu.memory_space<vmem>>, %arg4: memref<1x128xf32, #tpu.memory_space<vmem>>, %arg5: memref<8x128xf32, #tpu.memory_space<vmem>>, %arg6: memref<8x128xf32, #tpu.memory_space<vmem>>) attributes {dimension_semantics = [#tpu.dimension_semantics<parallel>, #tpu.dimension_semantics<arbitrary>], iteration_bounds = array<i64: 1, 1>, scalar_prefetch = 0 : i64, scratch_operands = 1 : i64, tpu.core_type = #tpu.core_type<tc>, window_params = [{transform_indices = @transform_0, window_bounds = array<i64: 8, 128>}, {transform_indices = @transform_1, window_bounds = array<i64: 128, 128>}, {pipeline_mode = #tpu.pipeline_mode<synchronous>, transform_indices = @transform_2, window_bounds = array<i64: 1, 128>}, {transform_indices = @transform_3, window_bounds = array<i64: 8, 128>}]} {
    %c0_i32 = arith.constant 0 : i32
    %0 = arith.cmpi eq, %arg1, %c0_i32 : i32
    %1 = arith.extui %0 : i1 to i32
    %c0_i32_0 = arith.constant 0 : i32
    %2 = arith.cmpi ne, %1, %c0_i32_0 : i32
    scf.if %2 {
      %cst_10 = arith.constant 0.000000e+00 : f32
      %12 = vector.broadcast %cst_10 : f32 to vector<8x128xf32>
      %c0_11 = arith.constant 0 : index
      %c0_12 = arith.constant 0 : index
      %13 = vector.load %arg6[%c0_11, %c0_12] : memref<8x128xf32, #tpu.memory_space<vmem>>, vector<8x128xf32>
      tpu.vector_store %arg6[%c0_11, %c0_12], %12 {strides = array<i32>} : memref<8x128xf32, #tpu.memory_space<vmem>>, vector<8x128xf32>,
    } else {
    }
    %c0 = arith.constant 0 : index
    %c0_1 = arith.constant 0 : index
    %3 = vector.load %arg6[%c0, %c0_1] : memref<8x128xf32, #tpu.memory_space<vmem>>, vector<8x128xf32>
    %c0_2 = arith.constant 0 : index
    %c0_3 = arith.constant 0 : index
    %4 = vector.load %arg2[%c0_2, %c0_3] : memref<8x128xf32, #tpu.memory_space<vmem>>, vector<8x128xf32>
    %c0_4 = arith.constant 0 : index
    %c0_5 = arith.constant 0 : index
    %5 = vector.load %arg3[%c0_4, %c0_5] : memref<128x128xf32, #tpu.memory_space<vmem>>, vector<128x128xf32>
    %cst = arith.constant dense<0.000000e+00> : vector<8x128xf32>
    %6 = tpu.matmul %4, %5, %cst {dimension_numbers = #tpu.dot_dimension_numbers<[1], [0], [0], [1], [0, 0, 1, 1], [], []>} : vector<8x128xf32>, vector<128x128xf32>, vector<8x128xf32> -> vector<8x128xf32>
    %7 = arith.addf %3, %6 : vector<8x128xf32>
    %c0_6 = arith.constant 0 : index
    %c0_7 = arith.constant 0 : index
    %8 = vector.load %arg6[%c0_6, %c0_7] : memref<8x128xf32, #tpu.memory_space<vmem>>, vector<8x128xf32>
    tpu.vector_store %arg6[%c0_6, %c0_7], %7 {strides = array<i32>} : memref<8x128xf32, #tpu.memory_space<vmem>>, vector<8x128xf32>,
    %c0_i32_8 = arith.constant 0 : i32
    %9 = arith.cmpi eq, %arg1, %c0_i32_8 : i32
    %10 = arith.extui %9 : i1 to i32
    %c0_i32_9 = arith.constant 0 : i32
    %11 = arith.cmpi ne, %10, %c0_i32_9 : i32
    scf.if %11 {
      %c0_10 = arith.constant 0 : index
      %c0_11 = arith.constant 0 : index
      %12 = vector.load %arg6[%c0_10, %c0_11] : memref<8x128xf32, #tpu.memory_space<vmem>>, vector<8x128xf32>
      %c0_12 = arith.constant 0 : index
      %c0_13 = arith.constant 0 : index
      %13 = vector.load %arg4[%c0_12, %c0_13] : memref<1x128xf32, #tpu.memory_space<vmem>>, vector<1x128xf32>
      %14 = vector.broadcast %13 : vector<1x128xf32> to vector<8x128xf32>
      %15 = arith.addf %12, %14 : vector<8x128xf32>
      %16 = arith.mulf %15, %15 : vector<8x128xf32>
      %cst_14 = arith.constant dense<0.000000e+00> : vector<8xf32>
      %17 = vector.multi_reduction <add>, %16, %cst_14 [1] : vector<8x128xf32> to vector<8xf32>
      %18 = vector.shape_cast %17 : vector<8xf32> to vector<8x1xf32>
      %cst_15 = arith.constant 1.000000e-24 : f32
      %19 = vector.broadcast %cst_15 : f32 to vector<8x1xf32>
      %20 = arith.maximumf %18, %19 : vector<8x1xf32>
      %21 = math.rsqrt %20 : vector<8x1xf32>
      %22 = vector.broadcast %21 : vector<8x1xf32> to vector<8x128xf32>
      %23 = arith.mulf %15, %22 : vector<8x128xf32>
      %c0_16 = arith.constant 0 : index
      %c0_17 = arith.constant 0 : index
      %24 = vector.load %arg5[%c0_16, %c0_17] : memref<8x128xf32, #tpu.memory_space<vmem>>, vector<8x128xf32>
      tpu.vector_store %arg5[%c0_16, %c0_17], %23 {strides = array<i32>} : memref<8x128xf32, #tpu.memory_space<vmem>>, vector<8x128xf32>,
    } else {
    }
    return
  }
  func.func @transform_0(%arg0: i32, %arg1: i32) -> (i32, i32) {
    %c0_i32 = arith.constant 0 : i32
    return %arg0, %arg1 : i32, i32
  }
  func.func @transform_1(%arg0: i32, %arg1: i32) -> (i32, i32) {
    %c0_i32 = arith.constant 0 : i32
    %c0_i32_0 = arith.constant 0 : i32
    return %arg1, %c0_i32 : i32, i32
  }
  func.func @transform_2(%arg0: i32, %arg1: i32) -> (i32, i32) {
    %c0_i32 = arith.constant 0 : i32
    %c0_i32_0 = arith.constant 0 : i32
    %c0_i32_1 = arith.constant 0 : i32
    return %c0_i32, %c0_i32_0 : i32, i32
  }
  func.func @transform_3(%arg0: i32, %arg1: i32) -> (i32, i32) {
    %c0_i32 = arith.constant 0 : i32
    %c0_i32_0 = arith.constant 0 : i32
    return %arg0, %c0_i32 : i32, i32
  }
}

</mosaic_0001>

<llo_original>
// kernel: model_with_normalize.1
$region0: #{model_with_normalize.1}
  #allocation0 [shape = 'u32[]', space=smem, size = 0x4, offset = 0x4, fixed_abs, tag = 'smem constant byte address 0x4 - core index']
  #allocation1 [shape = 'u32[144,128]{1,0:T(1,128)}', space=vmem, size = 0x12000, scoped, tag = 'internal scratch']
  #allocation2 [shape = 'f32[8,128]{1,0:T(8,128)}', space=vmem, size = 0x1000, scoped, tag = 'scratch operand']
  %s0 = inlined_call_operand.vmem [shape: f32[8,128], index: 0, kind: input, shape index: {}]
  %s1 = inlined_call_operand.vmem [shape: f32[128,128], index: 1, kind: input, shape index: {}]
  %s2 = inlined_call_operand.vmem [shape: f32[1,128], index: 2, kind: input, shape index: {}]
  %s3 = inlined_call_operand.hbm [shape: f32[8,128], index: 3, kind: output, shape index: {}]
  %s4 = sld [smem:[#allocation0]]
  $region30: #{model_with_normalize.1} parent=0
    _
  %s6 = ssub.s32 1, %s4
  %s7 = scalar_select 0, %s6, %s4
  $region1: #{model_with_normalize.1} parent=0
    #allocation3 [shape = 'u8[4096]{0}', space=vmem, size = 0x1000, scoped, tag = 'output window, operand 0, single buffered']
    #allocation4 [shape = 's32[1]{0}', space=sflag, size = 0x4, scoped, tag = 'scoped memory for model_with_normalize.1']
    %8 = vsyncpa [#allocation4], 0
    // Predicated region
    $region2: #{model_with_normalize.1} parent=1 // pred_check
      _
    $region3: #{model_with_normalize.1} parent=1 // pred_check_branch
      %10 = sbr.rel (0) target = $region5
    $region4: #{model_with_normalize.1} parent=1 // pred_region
      _
    $region5: #{model_with_normalize.1} parent=1 // pred_fallthru
      _
    // Predicated region
    $region6: #{model_with_normalize.1} parent=1 // pred_check
      _
    $region7: #{model_with_normalize.1} parent=1 // pred_check_branch
      %12 = sbr.rel (0) target = $region9
    $region8: #{model_with_normalize.1} parent=1 // pred_region
      _
    $region9: #{model_with_normalize.1} parent=1 // pred_fallthru
      _
    // Predicated region
    $region10: #{model_with_normalize.1} parent=1 // pred_check
      _
    $region11: #{model_with_normalize.1} parent=1 // pred_check_branch
      %14 = sbr.rel (0) target = $region13
    $region12: #{model_with_normalize.1} parent=1 // pred_region
      _
    $region13: #{model_with_normalize.1} parent=1 // pred_fallthru
      _
    %p15 = scmp.eq.s32.totalorder 0, 0
    // Predicated region
    $region14: #{model_with_normalize.1} parent=1 // pred_check
      %p16 = pneg %p15
    $region15: #{model_with_normalize.1} parent=1 // pred_check_branch
      %18 = sbr.rel (%p16) target = $region17
    $region16: #{model_with_normalize.1} parent=1 // pred_region
      %19 = vst [vmem:[#allocation2] sm:$0xff] 0.0
    $region17: #{model_with_normalize.1} parent=1 // pred_fallthru
      _
    %v20 = vld [vmem:[#allocation2] sm:$0xff]
    %v21 = vld [vmem:[%s0] sm:$0xff]
    %v22 = vld [vmem:[%s1] sm:$0xff]
    %v23 = vld [vmem:[%s1 + $0x8] sm:$0xff]
    %v24 = vld [vmem:[%s1 + $0x10] sm:$0xff]
    %v25 = vld [vmem:[%s1 + $0x18] sm:$0xff]
    %v26 = vld [vmem:[%s1 + $0x20] sm:$0xff]
    %v27 = vld [vmem:[%s1 + $0x28] sm:$0xff]
    %v28 = vld [vmem:[%s1 + $0x30] sm:$0xff]
    %v29 = vld [vmem:[%s1 + $0x38] sm:$0xff]
    %v30 = vld [vmem:[%s1 + $0x40] sm:$0xff]
    %v31 = vld [vmem:[%s1 + $0x48] sm:$0xff]
    %v32 = vld [vmem:[%s1 + $0x50] sm:$0xff]
    %v33 = vld [vmem:[%s1 + $0x58] sm:$0xff]
    %v34 = vld [vmem:[%s1 + $0x60] sm:$0xff]
    %v35 = vld [vmem:[%s1 + $0x68] sm:$0xff]
    %v36 = vld [vmem:[%s1 + $0x70] sm:$0xff]
    %v37 = vld [vmem:[%s1 + $0x78] sm:$0xff]
    %38 = vmatprep.subr.mxu0 0.0
    %39 = vmatpush1.msra.mxu0 %v22
    %40 = vmatprep.subr.mxu0 0.0
    %41 = vmatpush1.msra.mxu0 %v23
    %42 = vmatprep.subr.mxu0 0.0
    %43 = vmatpush1.msra.mxu0 %v24
    %44 = vmatprep.subr.mxu0 0.0
    %45 = vmatpush1.msra.mxu0 %v25
    %46 = vmatprep.subr.mxu0 0.0
    %47 = vmatpush1.msra.mxu0 %v26
    %48 = vmatprep.subr.mxu0 0.0
    %49 = vmatpush1.msra.mxu0 %v27
    %50 = vmatprep.subr.mxu0 0.0
    %51 = vmatpush1.msra.mxu0 %v28
    %52 = vmatprep.subr.mxu0 0.0
    %53 = vmatpush1.msra.mxu0 %v29
    %54 = vmatprep.subr.mxu0 0.0
    %55 = vmatpush1.msra.mxu0 %v30
    %56 = vmatprep.subr.mxu0 0.0
    %57 = vmatpush1.msra.mxu0 %v31
    %58 = vmatprep.subr.mxu0 0.0
    %59 = vmatpush1.msra.mxu0 %v32
    %60 = vmatprep.subr.mxu0 0.0
    %61 = vmatpush1.msra.mxu0 %v33
    %62 = vmatprep.subr.mxu0 0.0
    %63 = vmatpush1.msra.mxu0 %v34
    %64 = vmatprep.subr.mxu0 0.0
    %65 = vmatpush1.msra.mxu0 %v35
    %66 = vmatprep.subr.mxu0 0.0
    %67 = vmatpush1.msra.mxu0 %v36
    %68 = vmatprep.subr.mxu0 0.0
    %69 = vmatpush1.msra.mxu0 %v37
    %70 = vmatprep.subr.mxu0 0.0
    %71 = vmatpush1.msra.mxu0 0.0
    %72 = vmatprep.subr.mxu0 0.0
    %73 = vmatpush1.msra.mxu0 0.0
    %74 = vmatprep.subr.mxu0 0.0
    %75 = vmatpush1.msra.mxu0 0.0
    %76 = vmatprep.subr.mxu0 0.0
    %77 = vmatpush1.msra.mxu0 0.0
    %78 = vmatprep.subr.mxu0 0.0
    %79 = vmatpush1.msra.mxu0 0.0
    %80 = vmatprep.subr.mxu0 0.0
    %81 = vmatpush1.msra.mxu0 0.0
    %82 = vmatprep.subr.mxu0 0.0
    %83 = vmatpush1.msra.mxu0 0.0
    %84 = vmatprep.subr.mxu0 0.0
    %85 = vmatpush1.msra.mxu0 0.0
    %86 = vmatprep.subr.mxu0 0.0
    %87 = vmatpush1.msra.mxu0 0.0
    %88 = vmatprep.subr.mxu0 0.0
    %89 = vmatpush1.msra.mxu0 0.0
    %90 = vmatprep.subr.mxu0 0.0
    %91 = vmatpush1.msra.mxu0 0.0
    %92 = vmatprep.subr.mxu0 0.0
    %93 = vmatpush1.msra.mxu0 0.0
    %94 = vmatprep.subr.mxu0 0.0
    %95 = vmatpush1.msra.mxu0 0.0
    %96 = vmatprep.subr.mxu0 0.0
    %97 = vmatpush1.msra.mxu0 0.0
    %98 = vmatprep.subr.mxu0 0.0
    %99 = vmatpush1.msra.mxu0 0.0
    %100 = vmatprep.subr.mxu0 0.0
    %101 = vmatpush1.msra.mxu0 0.0
    %102 = vmatprep.mubr.f32.mxu0 0.0
    %103 = vmatmul.mubr.f32.gmra.mrb[0].mxu0 %v21
    %v104 = vpop.f32.mrb[0].mxu0
    %v105 = vadd.f32 0.0, %v104
    %v106 = vpop.f32.mrb[0].mxu0
    %107 = vdwg.mxu0
    %v108 = vadd.f32 %v20, %v105
    %109 = vst [vmem:[#allocation2] sm:$0xff] %v108
    // Predicated region
    $region18: #{model_with_normalize.1} parent=1 // pred_check
      %p110 = pneg %p15
    $region19: #{model_with_normalize.1} parent=1 // pred_check_branch
      %112 = sbr.rel (%p110) target = $region21
    $region20: #{model_with_normalize.1} parent=1 // pred_region
      %v113 = vld [vmem:[#allocation2] sm:$0xff]
      %v114 = vld [vmem:[%s2] sm:$0x1]
      %v116 = vlaneseq
      %v117 = vshrl.u32 %v116, 7
      %v118 = vsub.s32 0, %v117
      %v119 = vrot.slane %v114, %v118
      %v121 = vadd.f32 %v113, %v119
      %v122 = vmul.f32 %v121, %v121
      %123 = vadd.xlane.f32.xlu0 %v122
      %v124 = vpop.xlane.xlu0 %123
      %v125 = vmax.f32 %v124, 1e-24
      %v126 = vrsqrt.pop %v125
      %v127 = vmul.f32 %v121, %v126
      %128 = vst [vmem:[#allocation3] sm:$0xff] %v127
    $region21: #{model_with_normalize.1} parent=1 // pred_fallthru
      _
    // Predicated region
    $region22: #{model_with_normalize.1} parent=1 // pred_check
      _
    $region23: #{model_with_normalize.1} parent=1 // pred_check_branch
      %130 = sbr.rel (0) target = $region25
    $region24: #{model_with_normalize.1} parent=1 // pred_region
      %s132 = ssub.s32 128, 128
      %133 = vsyncadd [#allocation4], %s132
      %s135 = sshll.u32 [#allocation3], 4
      %s136 = int_to_ptr.vmem [resolvable:$true] %s135
      %138 = dma.vmem_to_hbm [thread:$0]  %s136, 128, %s3, [#allocation4]
    $region25: #{model_with_normalize.1} parent=1 // pred_fallthru
      _
    // Predicated region
    $region26: #{model_with_normalize.1} parent=1 // pred_check
      _
    $region27: #{model_with_normalize.1} parent=1 // pred_check_branch
      %140 = sbr.rel (0) target = $region29
    $region28: #{model_with_normalize.1} parent=1 // pred_region
      %141 = dma.done [#allocation4], 128
    $region29: #{model_with_normalize.1} parent=1 // pred_fallthru
      _
    %142 = vsyncpa [#allocation4], 1

// kernel: model_with_normalize.1
$region0: #{model_with_normalize.1}
  #allocation0 [shape = 'u32[]', space=smem, size = 0x4, offset = 0x4, fixed_abs, tag = 'smem constant byte address 0x4 - core index']
  #allocation1 [shape = 'u32[144,128]{1,0:T(1,128)}', space=vmem, size = 0x12000, scoped, tag = 'internal scratch']
  #allocation2 [shape = 'f32[8,128]{1,0:T(8,128)}', space=vmem, size = 0x1000, scoped, tag = 'scratch operand']
  %s0 = inlined_call_operand.vmem [shape: f32[8,128], index: 0, kind: input, shape index: {}]
  %s1 = inlined_call_operand.vmem [shape: f32[128,128], index: 1, kind: input, shape index: {}]
  %s2 = inlined_call_operand.vmem [shape: f32[1,128], index: 2, kind: input, shape index: {}]
  %s3 = inlined_call_operand.hbm [shape: f32[8,128], index: 3, kind: output, shape index: {}]
  %s4 = sld [smem:[#allocation0]]
  $region30: #{model_with_normalize.1} parent=0
    _
  %s6 = ssub.s32 1, %s4
  %s7 = scalar_select 0, %s6, %s4
  $region1: #{model_with_normalize.1} parent=0
    #allocation3 [shape = 'u8[4096]{0}', space=vmem, size = 0x1000, scoped, tag = 'output window, operand 0, single buffered']
    #allocation4 [shape = 's32[1]{0}', space=sflag, size = 0x4, scoped, tag = 'scoped memory for model_with_normalize.1']
    %8 = vsyncpa [#allocation4], 0
    // Predicated region
    $region2: #{model_with_normalize.1} parent=1 // pred_check
      _
    $region3: #{model_with_normalize.1} parent=1 // pred_check_branch
      %10 = sbr.rel (0) target = $region5
    $region4: #{model_with_normalize.1} parent=1 // pred_region
      _
    $region5: #{model_with_normalize.1} parent=1 // pred_fallthru
      _
    // Predicated region
    $region6: #{model_with_normalize.1} parent=1 // pred_check
      _
    $region7: #{model_with_normalize.1} parent=1 // pred_check_branch
      %12 = sbr.rel (0) target = $region9
    $region8: #{model_with_normalize.1} parent=1 // pred_region
      _
    $region9: #{model_with_normalize.1} parent=1 // pred_fallthru
      _
    // Predicated region
    $region10: #{model_with_normalize.1} parent=1 // pred_check
      _
    $region11: #{model_with_normalize.1} parent=1 // pred_check_branch
      %14 = sbr.rel (0) target = $region13
    $region12: #{model_with_normalize.1} parent=1 // pred_region
      _
    $region13: #{model_with_normalize.1} parent=1 // pred_fallthru
      _
    %p15 = scmp.eq.s32.totalorder 0, 0
    // Predicated region
    $region14: #{model_with_normalize.1} parent=1 // pred_check
      %p16 = pneg %p15
    $region15: #{model_with_normalize.1} parent=1 // pred_check_branch
      %18 = sbr.rel (%p16) target = $region17
    $region16: #{model_with_normalize.1} parent=1 // pred_region
      %19 = vst [vmem:[#allocation2] sm:$0xff] 0.0
    $region17: #{model_with_normalize.1} parent=1 // pred_fallthru
      _
    %v20 = vld [vmem:[#allocation2] sm:$0xff]
    %v21 = vld [vmem:[%s0] sm:$0xff]
    %v22 = vld [vmem:[%s1] sm:$0xff]
    %v23 = vld [vmem:[%s1 + $0x8] sm:$0xff]
    %v24 = vld [vmem:[%s1 + $0x10] sm:$0xff]
    %v25 = vld [vmem:[%s1 + $0x18] sm:$0xff]
    %v26 = vld [vmem:[%s1 + $0x20] sm:$0xff]
    %v27 = vld [vmem:[%s1 + $0x28] sm:$0xff]
    %v28 = vld [vmem:[%s1 + $0x30] sm:$0xff]
    %v29 = vld [vmem:[%s1 + $0x38] sm:$0xff]
    %v30 = vld [vmem:[%s1 + $0x40] sm:$0xff]
    %v31 = vld [vmem:[%s1 + $0x48] sm:$0xff]
    %v32 = vld [vmem:[%s1 + $0x50] sm:$0xff]
    %v33 = vld [vmem:[%s1 + $0x58] sm:$0xff]
    %v34 = vld [vmem:[%s1 + $0x60] sm:$0xff]
    %v35 = vld [vmem:[%s1 + $0x68] sm:$0xff]
    %v36 = vld [vmem:[%s1 + $0x70] sm:$0xff]
    %v37 = vld [vmem:[%s1 + $0x78] sm:$0xff]
    %38 = vmatprep.subr.mxu0 0.0
    %39 = vmatpush1.msra.mxu0 %v22
    %40 = vmatprep.subr.mxu0 0.0
    %41 = vmatpush1.msra.mxu0 %v23
    %42 = vmatprep.subr.mxu0 0.0
    %43 = vmatpush1.msra.mxu0 %v24
    %44 = vmatprep.subr.mxu0 0.0
    %45 = vmatpush1.msra.mxu0 %v25
    %46 = vmatprep.subr.mxu0 0.0
    %47 = vmatpush1.msra.mxu0 %v26
    %48 = vmatprep.subr.mxu0 0.0
    %49 = vmatpush1.msra.mxu0 %v27
    %50 = vmatprep.subr.mxu0 0.0
    %51 = vmatpush1.msra.mxu0 %v28
    %52 = vmatprep.subr.mxu0 0.0
    %53 = vmatpush1.msra.mxu0 %v29
    %54 = vmatprep.subr.mxu0 0.0
    %55 = vmatpush1.msra.mxu0 %v30
    %56 = vmatprep.subr.mxu0 0.0
    %57 = vmatpush1.msra.mxu0 %v31
    %58 = vmatprep.subr.mxu0 0.0
    %59 = vmatpush1.msra.mxu0 %v32
    %60 = vmatprep.subr.mxu0 0.0
    %61 = vmatpush1.msra.mxu0 %v33
    %62 = vmatprep.subr.mxu0 0.0
    %63 = vmatpush1.msra.mxu0 %v34
    %64 = vmatprep.subr.mxu0 0.0
    %65 = vmatpush1.msra.mxu0 %v35
    %66 = vmatprep.subr.mxu0 0.0
    %67 = vmatpush1.msra.mxu0 %v36
    %68 = vmatprep.subr.mxu0 0.0
    %69 = vmatpush1.msra.mxu0 %v37
    %70 = vmatprep.subr.mxu0 0.0
    %71 = vmatpush1.msra.mxu0 0.0
    %72 = vmatprep.subr.mxu0 0.0
    %73 = vmatpush1.msra.mxu0 0.0
    %74 = vmatprep.subr.mxu0 0.0
    %75 = vmatpush1.msra.mxu0 0.0
    %76 = vmatprep.subr.mxu0 0.0
    %77 = vmatpush1.msra.mxu0 0.0
    %78 = vmatprep.subr.mxu0 0.0
    %79 = vmatpush1.msra.mxu0 0.0
    %80 = vmatprep.subr.mxu0 0.0
    %81 = vmatpush1.msra.mxu0 0.0
    %82 = vmatprep.subr.mxu0 0.0
    %83 = vmatpush1.msra.mxu0 0.0
    %84 = vmatprep.subr.mxu0 0.0
    %85 = vmatpush1.msra.mxu0 0.0
    %86 = vmatprep.subr.mxu0 0.0
    %87 = vmatpush1.msra.mxu0 0.0
    %88 = vmatprep.subr.mxu0 0.0
    %89 = vmatpush1.msra.mxu0 0.0
    %90 = vmatprep.subr.mxu0 0.0
    %91 = vmatpush1.msra.mxu0 0.0
    %92 = vmatprep.subr.mxu0 0.0
    %93 = vmatpush1.msra.mxu0 0.0
    %94 = vmatprep.subr.mxu0 0.0
    %95 = vmatpush1.msra.mxu0 0.0
    %96 = vmatprep.subr.mxu0 0.0
    %97 = vmatpush1.msra.mxu0 0.0
    %98 = vmatprep.subr.mxu0 0.0
    %99 = vmatpush1.msra.mxu0 0.0
    %100 = vmatprep.subr.mxu0 0.0
    %101 = vmatpush1.msra.mxu0 0.0
    %102 = vmatprep.mubr.f32.mxu0 0.0
    %103 = vmatmul.mubr.f32.gmra.mrb[0].mxu0 %v21
    %v104 = vpop.f32.mrb[0].mxu0
    %v105 = vadd.f32 0.0, %v104
    %v106 = vpop.f32.mrb[0].mxu0
    %107 = vdwg.mxu0
    %v108 = vadd.f32 %v20, %v105
    %109 = vst [vmem:[#allocation2] sm:$0xff] %v108
    // Predicated region
    $region18: #{model_with_normalize.1} parent=1 // pred_check
      %p110 = pneg %p15
    $region19: #{model_with_normalize.1} parent=1 // pred_check_branch
      %112 = sbr.rel (%p110) target = $region21
    $region20: #{model_with_normalize.1} parent=1 // pred_region
      %v113 = vld [vmem:[#allocation2] sm:$0xff]
      %v114 = vld [vmem:[%s2] sm:$0x1]
      %v116 = vlaneseq
      %v117 = vshrl.u32 %v116, 7
      %v118 = vsub.s32 0, %v117
      %v119 = vrot.slane %v114, %v118
      %v121 = vadd.f32 %v113, %v119
      %v122 = vmul.f32 %v121, %v121
      %123 = vadd.xlane.f32.xlu0 %v122
      %v124 = vpop.xlane.xlu0 %123
      %v125 = vmax.f32 %v124, 1e-24
      %v126 = vrsqrt.pop %v125
      %v127 = vmul.f32 %v121, %v126
      %128 = vst [vmem:[#allocation3] sm:$0xff] %v127
    $region21: #{model_with_normalize.1} parent=1 // pred_fallthru
      _
    // Predicated region
    $region22: #{model_with_normalize.1} parent=1 // pred_check
      _
    $region23: #{model_with_normalize.1} parent=1 // pred_check_branch
      %130 = sbr.rel (0) target = $region25
    $region24: #{model_with_normalize.1} parent=1 // pred_region
      %s132 = ssub.s32 128, 128
      %133 = vsyncadd [#allocation4], %s132
      %s135 = sshll.u32 [#allocation3], 4
      %s136 = int_to_ptr.vmem [resolvable:$true] %s135
      %138 = dma.vmem_to_hbm [thread:$0]  %s136, 128, %s3, [#allocation4]
    $region25: #{model_with_normalize.1} parent=1 // pred_fallthru
      _
    // Predicated region
    $region26: #{model_with_normalize.1} parent=1 // pred_check
      _
    $region27: #{model_with_normalize.1} parent=1 // pred_check_branch
      %140 = sbr.rel (0) target = $region29
    $region28: #{model_with_normalize.1} parent=1 // pred_region
      %141 = dma.done [#allocation4], 128
    $region29: #{model_with_normalize.1} parent=1 // pred_fallthru
      _
    %142 = vsyncpa [#allocation4], 1

</llo_original>
